<compile_context>
chip_gen: v6e
topology: v6e:2x2x1
jax: 0.10.0
libtpu: 0.0.40
codegen_flags: <defaults>
</compile_context>

<pallas_src>
import jax
import jax.numpy as jnp
from jax.experimental import pallas as pl
from jax.experimental.pallas import tpu as pltpu


def _round_up(n, m):
    return ((n + m - 1) // m) * m


def _cdiv(a, b):
    return (a + b - 1) // b


def _vmem_ceiling_bytes():
    """Generation-aware usable-VMEM ceiling (~75% of physical capacity)."""
    try:
        cap = pltpu.get_tpu_info().vmem_capacity_bytes
    except Exception:
        cap = 64 << 20            # conservative fallback: v7x physical VMEM
    return (cap * 3) // 4


def _working_set_bytes(tb, tk, hp, cp):
    """Double-buffered block footprint + scratch for one kernel instance."""
    return (2 * tb * tk * 4        # x blocks (f32)
            + 2 * tk * hp * 2      # W1 block(s) (bf16)
            + 2 * 1 * hp * 4       # b1 (f32)
            + 2 * hp * cp * 2      # W2 (bf16, resident)
            + 2 * 1 * cp * 4       # b2 (f32)
            + 2 * tb * cp * 4      # output tile (f32)
            + tb * hp * 4)         # h accumulator scratch (f32)


def prepare_probe_params(w1, b1, w2, b2, *, tb_pref=512, tk_pref=2048,
                         _force_tk=None):
    """Pad/cast the frozen + head parameters ONCE and plan the K tiling.

    Call at probe-setup time and reuse the returned dict for every forward call;
    this removes the per-call re-read/re-write of W1/W2 in HBM.
    """
    F, hidden = w1.shape
    num_classes = w2.shape[1]
    hp = _round_up(hidden, 128)          # hidden padded to full lanes
    cp = _round_up(num_classes, 128)     # classes padded to full lanes (dense vst)

    budget = int(_vmem_ceiling_bytes() / 1.4)   # 1.4x headroom at plan time

    if _force_tk is not None:
        tk = _force_tk                   # test hook: force the K-tiled path
    elif _working_set_bytes(tb_pref, F, hp, cp) <= budget:
        tk = F          # nk == 1: W1 resident, streamed exactly once per call
    else:
        tk = tk_pref    # huge F: large K slabs amortize per-step overhead
        while tk > 512 and _working_set_bytes(tb_pref, tk, hp, cp) > budget:
            tk //= 2
    f_pad = _round_up(F, tk)

    b1 = jnp.asarray(b1).reshape(1, -1)   # accept 1-D nn.Linear biases
    b2 = jnp.asarray(b2).reshape(1, -1)
    w1p = jnp.pad(w1, ((0, f_pad - F), (0, hp - hidden))).astype(jnp.bfloat16)
    b1p = jnp.pad(b1, ((0, 0), (0, hp - hidden))).astype(jnp.float32)
    w2p = jnp.pad(w2, ((0, hp - hidden), (0, cp - num_classes))).astype(jnp.bfloat16)
    b2p = jnp.pad(b2, ((0, 0), (0, cp - num_classes))).astype(jnp.float32)

    return dict(w1=w1p, b1=b1p, w2=w2p, b2=b2p,
                F=F, F_pad=f_pad, TK=tk, HP=hp, CP=cp,
                hidden=hidden, num_classes=num_classes, tb_pref=tb_pref)


def probe_kernel(x_ref, w1_ref, b1_ref, w2_ref, b2_ref, o_ref, h_acc):
    """Grid = (batch tiles, K tiles over F).  h_acc: (TB, HP) f32 scratch."""
    k = pl.program_id(1)

    @pl.when(k == 0)
    def _():
        h_acc[...] = jnp.zeros_like(h_acc)

    # Frozen backbone matmul: x cast to bf16 in-kernel, f32 MXU accumulation.
    h_acc[...] += jnp.dot(x_ref[...].astype(jnp.bfloat16), w1_ref[...],
                          preferred_element_type=jnp.float32)

    @pl.when(k == pl.num_programs(1) - 1)
    def _():
        # Bias + ReLU written back into the scratch (f32 VPU; low vreg pressure).
        h_acc[...] = jnp.maximum(h_acc[...] + b1_ref[...], 0.0)
        # Trainable head: bf16 MXU inputs, f32 accumulate + bias, lane-dense store.
        o_ref[...] = (jnp.dot(h_acc[...].astype(jnp.bfloat16), w2_ref[...],
                              preferred_element_type=jnp.float32)
                      + b2_ref[...]).astype(o_ref.dtype)


def head_model_forward(x_nchw, params):
    """x_nchw: [B, C, H, W] float32.  Returns logits [B, NUM_CLASSES] float32."""
    B = x_nchw.shape[0]
    F, F_pad, TK = params["F"], params["F_pad"], params["TK"]
    HP, CP = params["HP"], params["CP"]
    num_classes = params["num_classes"]

    xf = x_nchw.reshape(B, -1)                 # f32, NCHW row-major flatten
    assert xf.shape[1] == F, "feature size mismatch with prepared parameters"

    # ---- batch tiling: keep B_pad/B ~ 1; use >= 2 batch tiles when B >= 16 so
    # the 'parallel' axis can shard across both v7x TensorCores. ---------------
    nb = _cdiv(B, params["tb_pref"])
    if B >= 16:
        nb = max(nb, 2)
    if nb == 1:
        TB, B_pad = B, B                       # block == full batch dim: no padding
    else:
        TB = _round_up(_cdiv(B, nb), 8)
        B_pad = nb * TB
    if B_pad > B:
        xf = jnp.pad(xf, ((0, B_pad - B), (0, 0)))
    if F_pad > F:                              # only in the huge-F K-tiled case
        xf = jnp.pad(xf, ((0, 0), (0, F_pad - F)))
    nk = F_pad // TK

    # ---- VMEM limit from the actual working set; generation-aware ceiling. ---
    wset = _working_set_bytes(TB, TK, HP, CP)
    vmem_limit = int(min(_vmem_ceiling_bytes(),
                         max(int(wset * 1.3) + (1 << 20), wset + (1 << 20))))

    cost = pl.CostEstimate(
        flops=2 * B_pad * F_pad * HP + 2 * B_pad * HP * CP,
        transcendentals=0,
        bytes_accessed=(B_pad * F_pad * 4 + F_pad * HP * 2 + HP * CP * 2
                        + HP * 4 + CP * 4 + B_pad * CP * 4),
    )

    out_pad = pl.pallas_call(
        probe_kernel,
        out_shape=jax.ShapeDtypeStruct((B_pad, CP), jnp.float32),
        grid_spec=pltpu.PrefetchScalarGridSpec(
            num_scalar_prefetch=0,
            grid=(nb, nk),                                    # reduction axis last
            in_specs=[
                pl.BlockSpec((TB, TK), lambda b, k: (b, k)),  # x tile (f32)
                pl.BlockSpec((TK, HP), lambda b, k: (k, 0)),  # W1 slab (bf16)
                pl.BlockSpec((1, HP), lambda b, k: (0, 0)),   # b1 (resident)
                pl.BlockSpec((HP, CP), lambda b, k: (0, 0)),  # W2 (resident)
                pl.BlockSpec((1, CP), lambda b, k: (0, 0)),   # b2 (resident)
            ],
            out_specs=pl.BlockSpec((TB, CP), lambda b, k: (b, 0)),
            scratch_shapes=[pltpu.VMEM((TB, HP), jnp.float32)],
        ),
        compiler_params=pltpu.CompilerParams(
            dimension_semantics=("parallel", "arbitrary"),
            vmem_limit_bytes=vmem_limit,
        ),
        cost_estimate=cost,
    )(xf, params["w1"], params["b1"], params["w2"], params["b2"])

    return out_pad[:B, :num_classes]   # strip batch/class padding


def reference_f32(x_nchw, w1, b1, w2, b2):
    xf = x_nchw.reshape(x_nchw.shape[0], -1)
    h = jnp.maximum(xf @ w1 + b1, 0.0)
    return h @ w2 + b2


def reference_mixed(x_nchw, w1, b1, w2, b2):
    """Same mixed precision as the kernel: bf16 matmul inputs, f32 accumulate."""
    xf = x_nchw.reshape(x_nchw.shape[0], -1).astype(jnp.bfloat16)
    h = jnp.dot(xf, w1.astype(jnp.bfloat16),
                preferred_element_type=jnp.float32) + b1
    h = jnp.maximum(h, 0.0)
    return jnp.dot(h.astype(jnp.bfloat16), w2.astype(jnp.bfloat16),
                   preferred_element_type=jnp.float32) + b2


def _run_case(B, C, H, W, hidden, num_classes, **prep_kwargs):
    F = C * H * W
    key = jax.random.PRNGKey(0)
    kx, k1, kb1, k2, kb2 = jax.random.split(key, 5)

    x = jax.random.normal(kx, (B, C, H, W), dtype=jnp.float32)
    # Deterministic synthetic parameters (no checkpoint load); nn.Linear-style 1-D biases.
    w1 = jax.random.normal(k1, (F, hidden), dtype=jnp.float32) * (1.0 / F ** 0.5)
    b1 = jax.random.normal(kb1, (hidden,), dtype=jnp.float32) * 0.01
    w2 = jax.random.normal(k2, (hidden, num_classes), dtype=jnp.float32) * (1.0 / hidden ** 0.5)
    b2 = jax.random.normal(kb2, (num_classes,), dtype=jnp.float32) * 0.01

    params = prepare_probe_params(w1, b1, w2, b2, **prep_kwargs)  # hoisted pad/cast
    out = jax.block_until_ready(head_model_forward(x, params))
    assert out.shape == (B, num_classes)

    ref_m = reference_mixed(x, w1, b1, w2, b2)
    ref_f = reference_f32(x, w1, b1, w2, b2)
    assert jnp.allclose(out, ref_m, atol=5e-3, rtol=5e-3), "mismatch vs mixed-precision reference"
    assert jnp.allclose(out, ref_f, atol=5e-2, rtol=5e-2), "mismatch vs f32 reference"


if __name__ == "__main__":
    # Small shapes consistent with the module's forward (NCHW image -> logits).
    # Case 1: default plan -> nk == 1 (W1 resident, one DMA), single batch tile (TB == B).
    _run_case(B=2, C=4, H=16, W=16, hidden=32, num_classes=8)
    # Case 2: exercise the K-tiled accumulator path (forced TK=512 -> nk=2) and the
    # nb >= 2 batch split with minimal padding (B=20 -> 2 tiles of 16 rows).
    _run_case(B=20, C=4, H=16, W=16, hidden=32, num_classes=8, _force_tk=512)
    print("KERNEL_OK")
</pallas_src>

<mosaic_0001>
module attributes {stable_mosaic.version = 11 : i64} {
  func.func @probe_kernel(%arg0: i32, %arg1: i32, %arg2: memref<2x1024xf32, #tpu.memory_space<vmem>>, %arg3: memref<1024x128xbf16, #tpu.memory_space<vmem>>, %arg4: memref<1x128xf32, #tpu.memory_space<vmem>>, %arg5: memref<128x128xbf16, #tpu.memory_space<vmem>>, %arg6: memref<1x128xf32, #tpu.memory_space<vmem>>, %arg7: memref<2x128xf32, #tpu.memory_space<vmem>>, %arg8: memref<2x128xf32, #tpu.memory_space<vmem>>) attributes {dimension_semantics = [#tpu.dimension_semantics<parallel>, #tpu.dimension_semantics<arbitrary>], iteration_bounds = array<i64: 1, 1>, scalar_prefetch = 0 : i64, scratch_operands = 1 : i64, tpu.core_type = #tpu.core_type<tc>, window_params = [{transform_indices = @transform_0, window_bounds = array<i64: 2, 1024>}, {transform_indices = @transform_1, window_bounds = array<i64: 1024, 128>}, {pipeline_mode = #tpu.pipeline_mode<synchronous>, transform_indices = @transform_2, window_bounds = array<i64: 1, 128>}, {pipeline_mode = #tpu.pipeline_mode<synchronous>, transform_indices = @transform_3, window_bounds = array<i64: 128, 128>}, {pipeline_mode = #tpu.pipeline_mode<synchronous>, transform_indices = @transform_4, window_bounds = array<i64: 1, 128>}, {transform_indices = @transform_5, window_bounds = array<i64: 2, 128>}]} {
    %c0_i32 = arith.constant 0 : i32
    %0 = arith.cmpi eq, %arg1, %c0_i32 : i32
    %1 = arith.extui %0 : i1 to i32
    %c0_i32_0 = arith.constant 0 : i32
    %2 = arith.cmpi ne, %1, %c0_i32_0 : i32
    scf.if %2 {
      %cst_10 = arith.constant 0.000000e+00 : f32
      %13 = vector.broadcast %cst_10 : f32 to vector<2x128xf32>
      %c0_11 = arith.constant 0 : index
      %c0_12 = arith.constant 0 : index
      %14 = vector.load %arg8[%c0_11, %c0_12] : memref<2x128xf32, #tpu.memory_space<vmem>>, vector<2x128xf32>
      tpu.vector_store %arg8[%c0_11, %c0_12], %13 {strides = array<i32>} : memref<2x128xf32, #tpu.memory_space<vmem>>, vector<2x128xf32>,
    } else {
    }
    %c0 = arith.constant 0 : index
    %c0_1 = arith.constant 0 : index
    %3 = vector.load %arg8[%c0, %c0_1] : memref<2x128xf32, #tpu.memory_space<vmem>>, vector<2x128xf32>
    %c0_2 = arith.constant 0 : index
    %c0_3 = arith.constant 0 : index
    %4 = vector.load %arg2[%c0_2, %c0_3] : memref<2x1024xf32, #tpu.memory_space<vmem>>, vector<2x1024xf32>
    %5 = arith.truncf %4 : vector<2x1024xf32> to vector<2x1024xbf16>
    %c0_4 = arith.constant 0 : index
    %c0_5 = arith.constant 0 : index
    %6 = vector.load %arg3[%c0_4, %c0_5] : memref<1024x128xbf16, #tpu.memory_space<vmem>>, vector<1024x128xbf16>
    %cst = arith.constant dense<0.000000e+00> : vector<2x128xf32>
    %7 = tpu.matmul %5, %6, %cst {dimension_numbers = #tpu.dot_dimension_numbers<[1], [0], [0], [1], [0, 0, 1, 1], [], []>} : vector<2x1024xbf16>, vector<1024x128xbf16>, vector<2x128xf32> -> vector<2x128xf32>
    %8 = arith.addf %3, %7 : vector<2x128xf32>
    %c0_6 = arith.constant 0 : index
    %c0_7 = arith.constant 0 : index
    %9 = vector.load %arg8[%c0_6, %c0_7] : memref<2x128xf32, #tpu.memory_space<vmem>>, vector<2x128xf32>
    tpu.vector_store %arg8[%c0_6, %c0_7], %8 {strides = array<i32>} : memref<2x128xf32, #tpu.memory_space<vmem>>, vector<2x128xf32>,
    %c0_i32_8 = arith.constant 0 : i32
    %10 = arith.cmpi eq, %arg1, %c0_i32_8 : i32
    %11 = arith.extui %10 : i1 to i32
    %c0_i32_9 = arith.constant 0 : i32
    %12 = arith.cmpi ne, %11, %c0_i32_9 : i32
    scf.if %12 {
      %c0_10 = arith.constant 0 : index
      %c0_11 = arith.constant 0 : index
      %13 = vector.load %arg8[%c0_10, %c0_11] : memref<2x128xf32, #tpu.memory_space<vmem>>, vector<2x128xf32>
      %c0_12 = arith.constant 0 : index
      %c0_13 = arith.constant 0 : index
      %14 = vector.load %arg4[%c0_12, %c0_13] : memref<1x128xf32, #tpu.memory_space<vmem>>, vector<1x128xf32>
      %15 = vector.broadcast %14 : vector<1x128xf32> to vector<2x128xf32>
      %16 = arith.addf %13, %15 : vector<2x128xf32>
      %cst_14 = arith.constant 0.000000e+00 : f32
      %17 = vector.broadcast %cst_14 : f32 to vector<2x128xf32>
      %18 = arith.maximumf %16, %17 : vector<2x128xf32>
      %c0_15 = arith.constant 0 : index
      %c0_16 = arith.constant 0 : index
      %19 = vector.load %arg8[%c0_15, %c0_16] : memref<2x128xf32, #tpu.memory_space<vmem>>, vector<2x128xf32>
      tpu.vector_store %arg8[%c0_15, %c0_16], %18 {strides = array<i32>} : memref<2x128xf32, #tpu.memory_space<vmem>>, vector<2x128xf32>,
      %c0_17 = arith.constant 0 : index
      %c0_18 = arith.constant 0 : index
      %20 = vector.load %arg8[%c0_17, %c0_18] : memref<2x128xf32, #tpu.memory_space<vmem>>, vector<2x128xf32>
      %21 = arith.truncf %20 : vector<2x128xf32> to vector<2x128xbf16>
      %c0_19 = arith.constant 0 : index
      %c0_20 = arith.constant 0 : index
      %22 = vector.load %arg5[%c0_19, %c0_20] : memref<128x128xbf16, #tpu.memory_space<vmem>>, vector<128x128xbf16>
      %cst_21 = arith.constant dense<0.000000e+00> : vector<2x128xf32>
      %23 = tpu.matmul %21, %22, %cst_21 {dimension_numbers = #tpu.dot_dimension_numbers<[1], [0], [0], [1], [0, 0, 1, 1], [], []>} : vector<2x128xbf16>, vector<128x128xbf16>, vector<2x128xf32> -> vector<2x128xf32>
      %c0_22 = arith.constant 0 : index
      %c0_23 = arith.constant 0 : index
      %24 = vector.load %arg6[%c0_22, %c0_23] : memref<1x128xf32, #tpu.memory_space<vmem>>, vector<1x128xf32>
      %25 = vector.broadcast %24 : vector<1x128xf32> to vector<2x128xf32>
      %26 = arith.addf %23, %25 : vector<2x128xf32>
      %c0_24 = arith.constant 0 : index
      %c0_25 = arith.constant 0 : index
      %27 = vector.load %arg7[%c0_24, %c0_25] : memref<2x128xf32, #tpu.memory_space<vmem>>, vector<2x128xf32>
      tpu.vector_store %arg7[%c0_24, %c0_25], %26 {strides = array<i32>} : memref<2x128xf32, #tpu.memory_space<vmem>>, vector<2x128xf32>,
    } else {
    }
    return
  }
  func.func @transform_0(%arg0: i32, %arg1: i32) -> (i32, i32) {
    %c0_i32 = arith.constant 0 : i32
    return %arg0, %arg1 : i32, i32
  }
  func.func @transform_1(%arg0: i32, %arg1: i32) -> (i32, i32) {
    %c0_i32 = arith.constant 0 : i32
    %c0_i32_0 = arith.constant 0 : i32
    return %arg1, %c0_i32 : i32, i32
  }
  func.func @transform_2(%arg0: i32, %arg1: i32) -> (i32, i32) {
    %c0_i32 = arith.constant 0 : i32
    %c0_i32_0 = arith.constant 0 : i32
    %c0_i32_1 = arith.constant 0 : i32
    return %c0_i32, %c0_i32_0 : i32, i32
  }
  func.func @transform_3(%arg0: i32, %arg1: i32) -> (i32, i32) {
    %c0_i32 = arith.constant 0 : i32
    %c0_i32_0 = arith.constant 0 : i32
    %c0_i32_1 = arith.constant 0 : i32
    return %c0_i32, %c0_i32_0 : i32, i32
  }
  func.func @transform_4(%arg0: i32, %arg1: i32) -> (i32, i32) {
    %c0_i32 = arith.constant 0 : i32
    %c0_i32_0 = arith.constant 0 : i32
    %c0_i32_1 = arith.constant 0 : i32
    return %c0_i32, %c0_i32_0 : i32, i32
  }
  func.func @transform_5(%arg0: i32, %arg1: i32) -> (i32, i32) {
    %c0_i32 = arith.constant 0 : i32
    %c0_i32_0 = arith.constant 0 : i32
    return %arg0, %c0_i32 : i32, i32
  }
}

</mosaic_0001>

<llo_original>
// kernel: tpu_custom_call.1
$region0: #{tpu_custom_call.1}
  #allocation0 [shape = 'u32[]', space=smem, size = 0x4, offset = 0x4, fixed_abs, tag = 'smem constant byte address 0x4 - core index']
  #allocation1 [shape = 'u32[144,128]{1,0:T(1,128)}', space=vmem, size = 0x12000, scoped, tag = 'internal scratch']
  #allocation2 [shape = 'f32[2,128]{1,0:T(2,128)}', space=vmem, size = 0x400, scoped, tag = 'scratch operand']
  %s0 = inlined_call_operand.hbm [shape: f32[2,1024], index: 0, kind: input, shape index: {}]
  %s1 = inlined_call_operand.hbm [shape: bf16[1024,128], index: 1, kind: input, shape index: {}]
  %s2 = inlined_call_operand.vmem [shape: f32[1,128], index: 2, kind: input, shape index: {}]
  %s3 = inlined_call_operand.hbm [shape: bf16[128,128], index: 3, kind: input, shape index: {}]
  %s4 = inlined_call_operand.vmem [shape: f32[1,128], index: 4, kind: input, shape index: {}]
  %s5 = inlined_call_operand.hbm [shape: f32[2,128], index: 5, kind: output, shape index: {}]
  %s6 = sld [smem:[#allocation0]]
  $region50: #{tpu_custom_call.1} parent=0
    _
  %s8 = ssub.s32 1, %s6
  %s9 = scalar_select 0, %s8, %s6
  $region1: #{tpu_custom_call.1} parent=0
    #allocation3 [shape = 'u8[8192]{0}', space=vmem, size = 0x2000, scoped, tag = 'input window, operand 0, single buffered']
    #allocation4 [shape = 's32[1]{0}', space=sflag, size = 0x4, scoped, tag = 'scoped memory for tpu_custom_call.1']
    #allocation5 [shape = 's32[1]{0}', space=sflag, size = 0x4, scoped, tag = 'scoped memory for tpu_custom_call.1']
    #allocation6 [shape = 'u8[262144]{0}', space=vmem, size = 0x40000, scoped, tag = 'input window, operand 1, single buffered']
    #allocation7 [shape = 's32[1]{0}', space=sflag, size = 0x4, scoped, tag = 'scoped memory for tpu_custom_call.1']
    #allocation8 [shape = 'u8[32768]{0}', space=vmem, size = 0x8000, scoped, tag = 'input window, operand 3, single buffered']
    #allocation9 [shape = 'u8[1024]{0}', space=vmem, size = 0x400, scoped, tag = 'output window, operand 0, single buffered']
    %10 = vsyncpa [#allocation4], 0
    %11 = vsyncpa [#allocation7], 0
    %12 = vsyncpa [#allocation5], 0
    // Predicated region
    $region2: #{tpu_custom_call.1} parent=1 // pred_check
      _
    $region3: #{tpu_custom_call.1} parent=1 // pred_check_branch
      %14 = sbr.rel (0) target = $region5
    $region4: #{tpu_custom_call.1} parent=1 // pred_region
      %s16 = ssub.s32 256, 256
      %17 = vsyncadd [#allocation4], %s16
      %s19 = sshll.u32 [#allocation3], 4
      %s20 = int_to_ptr.vmem [resolvable:$true] %s19
      %22 = dma.hbm_to_vmem [thread:$0]  %s0, 256, %s20, [#allocation4]
    $region5: #{tpu_custom_call.1} parent=1 // pred_fallthru
      _
    // Predicated region
    $region6: #{tpu_custom_call.1} parent=1 // pred_check
      _
    $region7: #{tpu_custom_call.1} parent=1 // pred_check_branch
      %24 = sbr.rel (0) target = $region9
    $region8: #{tpu_custom_call.1} parent=1 // pred_region
      %s26 = ssub.s32 8192, 8192
      %27 = vsyncadd [#allocation7], %s26
      %s28 = sshll.u32 [#allocation6], 4
      %s29 = int_to_ptr.vmem [resolvable:$true] %s28
      %34 = dma.hbm_to_vmem [thread:$0]  %s1, 8192, %s29, [#allocation7], 64, 64, 4
    $region9: #{tpu_custom_call.1} parent=1 // pred_fallthru
      _
    // Predicated region
    $region10: #{tpu_custom_call.1} parent=1 // pred_check
      _
    $region11: #{tpu_custom_call.1} parent=1 // pred_check_branch
      %36 = sbr.rel (0) target = $region13
    $region12: #{tpu_custom_call.1} parent=1 // pred_region
      _
    $region13: #{tpu_custom_call.1} parent=1 // pred_fallthru
      _
    // Predicated region
    $region14: #{tpu_custom_call.1} parent=1 // pred_check
      _
    $region15: #{tpu_custom_call.1} parent=1 // pred_check_branch
      %38 = sbr.rel (0) target = $region17
    $region16: #{tpu_custom_call.1} parent=1 // pred_region
      %s40 = ssub.s32 1024, 1024
      %41 = vsyncadd [#allocation7], %s40
      %s42 = sshll.u32 [#allocation8], 4
      %s43 = int_to_ptr.vmem [resolvable:$true] %s42
      %48 = dma.hbm_to_vmem [thread:$0]  %s3, 1024, %s43, [#allocation7], 64, 64, 4
    $region17: #{tpu_custom_call.1} parent=1 // pred_fallthru
      _
    // Predicated region
    $region18: #{tpu_custom_call.1} parent=1 // pred_check
      _
    $region19: #{tpu_custom_call.1} parent=1 // pred_check_branch
      %50 = sbr.rel (0) target = $region21
    $region20: #{tpu_custom_call.1} parent=1 // pred_region
      _
    $region21: #{tpu_custom_call.1} parent=1 // pred_fallthru
      _
    // Predicated region
    $region22: #{tpu_custom_call.1} parent=1 // pred_check
      _
    $region23: #{tpu_custom_call.1} parent=1 // pred_check_branch
      %52 = sbr.rel (0) target = $region25
    $region24: #{tpu_custom_call.1} parent=1 // pred_region
      %53 = dma.done [#allocation4], 256
    $region25: #{tpu_custom_call.1} parent=1 // pred_fallthru
      _
    // Predicated region
    $region26: #{tpu_custom_call.1} parent=1 // pred_check
      _
    $region27: #{tpu_custom_call.1} parent=1 // pred_check_branch
      %55 = sbr.rel (0) target = $region29
    $region28: #{tpu_custom_call.1} parent=1 // pred_region
      %56 = dma.done [#allocation7], 8192
    $region29: #{tpu_custom_call.1} parent=1 // pred_fallthru
      _
    // Predicated region
    $region30: #{tpu_custom_call.1} parent=1 // pred_check
      _
    $region31: #{tpu_custom_call.1} parent=1 // pred_check_branch
      %58 = sbr.rel (0) target = $region33
    $region32: #{tpu_custom_call.1} parent=1 // pred_region
      %59 = dma.done [#allocation7], 1024
    $region33: #{tpu_custom_call.1} parent=1 // pred_fallthru
      _
    %p61 = scmp.eq.s32.totalorder 0, 0
    // Predicated region
    $region34: #{tpu_custom_call.1} parent=1 // pred_check
      %p62 = pneg %p61
    $region35: #{tpu_custom_call.1} parent=1 // pred_check_branch
      %64 = sbr.rel (%p62) target = $region37
    $region36: #{tpu_custom_call.1} parent=1 // pred_region
      %65 = vst [vmem:[#allocation2] sm:$0x3] 0.0
    $region37: #{tpu_custom_call.1} parent=1 // pred_fallthru
      _
    %v66 = vld [vmem:[#allocation2] sm:$0x3]
    %v67 = vld [vmem:[#allocation3] sm:$0xff]
    %v68 = vld [vmem:[#allocation3 + $0x8] sm:$0xff]
    %v71 = vcombine.high %v67, %v67
    %v73 = vunpack.c.l.s4 1983009808
    %v74 = vunpack.c.0.s8 %v73
    %v75 = vlaneseq
    %v76 = vshrl.u32 %v75, 7
    %v77 = vsub.s32 %v74, %v76
    %v78 = vrot.slane %v67, %v77
    %v80 = vunpack.c.l.s4 1983009808
    %v81 = vunpack.c.0.s8 %v80
    %v82 = vlaneseq
    %v83 = vshrl.u32 %v82, 7
    %v84 = vsub.s32 %v81, %v83
    %v85 = vrot.slane %v71, %v84
    %v86 = vcombine.high %v78, %v78
    %v87 = vcombine.high %v85, %v85
    %v88 = vcombine.high %v68, %v68
    %v90 = vunpack.c.l.s4 1983009808
    %v91 = vunpack.c.0.s8 %v90
    %v92 = vlaneseq
    %v93 = vshrl.u32 %v92, 7
    %v94 = vsub.s32 %v91, %v93
    %v95 = vrot.slane %v68, %v94
    %v97 = vunpack.c.l.s4 1983009808
    %v98 = vunpack.c.0.s8 %v97
    %v99 = vlaneseq
    %v100 = vshrl.u32 %v99, 7
    %v101 = vsub.s32 %v98, %v100
    %v102 = vrot.slane %v88, %v101
    %v103 = vcombine.high %v95, %v95
    %v104 = vcombine.high %v102, %v102
    %v113 = vpack.c.bf16 %v78, %v78
    %v114 = vpack.c.bf16 %v86, %v86
    %v115 = vpack.c.bf16 %v85, %v85
    %v116 = vpack.c.bf16 %v87, %v87
    %v117 = vpack.c.bf16 %v95, %v95
    %v118 = vpack.c.bf16 %v103, %v103
    %v119 = vpack.c.bf16 %v102, %v102
    %v120 = vpack.c.bf16 %v104, %v104
    %v121 = vld [vmem:[#allocation6] sm:$0xf]
    %v122 = vld [vmem:[#allocation6 + $0x4] sm:$0xf]
    %v123 = vld [vmem:[#allocation6 + $0x8] sm:$0xf]
    %v124 = vld [vmem:[#allocation6 + $0xc] sm:$0xf]
    %v125 = vld [vmem:[#allocation6 + $0x10] sm:$0xf]
    %v126 = vld [vmem:[#allocation6 + $0x14] sm:$0xf]
    %v127 = vld [vmem:[#allocation6 + $0x18] sm:$0xf]
    %v128 = vld [vmem:[#allocation6 + $0x1c] sm:$0xf]
    %v129 = vld [vmem:[#allocation6 + $0x20] sm:$0xf]
    %v130 = vld [vmem:[#allocation6 + $0x24] sm:$0xf]
    %v131 = vld [vmem:[#allocation6 + $0x28] sm:$0xf]
    %v132 = vld [vmem:[#allocation6 + $0x2c] sm:$0xf]
    %v133 = vld [vmem:[#allocation6 + $0x30] sm:$0xf]
    %v134 = vld [vmem:[#allocation6 + $0x34] sm:$0xf]
    %v135 = vld [vmem:[#allocation6 + $0x38] sm:$0xf]
    %v136 = vld [vmem:[#allocation6 + $0x3c] sm:$0xf]
    %v137 = vld [vmem:[#allocation6 + $0x40] sm:$0xf]
    %v138 = vld [vmem:[#allocation6 + $0x44] sm:$0xf]
    %v139 = vld [vmem:[#allocation6 + $0x48] sm:$0xf]
    %v140 = vld [vmem:[#allocation6 + $0x4c] sm:$0xf]
    %v141 = vld [vmem:[#allocation6 + $0x50] sm:$0xf]
    %v142 = vld [vmem:[#allocation6 + $0x54] sm:$0xf]
    %v143 = vld [vmem:[#allocation6 + $0x58] sm:$0xf]
    %v144 = vld [vmem:[#allocation6 + $0x5c] sm:$0xf]
    %v145 = vld [vmem:[#allocation6 + $0x60] sm:$0xf]
    %v146 = vld [vmem:[#allocation6 + $0x64] sm:$0xf]
    %v147 = vld [vmem:[#allocation6 + $0x68] sm:$0xf]
    %v148 = vld [vmem:[#allocation6 + $0x6c] sm:$0xf]
    %v149 = vld [vmem:[#allocation6 + $0x70] sm:$0xf]
    %v150 = vld [vmem:[#allocation6 + $0x74] sm:$0xf]
    %v151 = vld [vmem:[#allocation6 + $0x78] sm:$0xf]
    %v152 = vld [vmem:[#allocation6 + $0x7c] sm:$0xf]
    %v153 = vld [vmem:[#allocation6 + $0x80] sm:$0xf]
    %v154 = vld [vmem:[#allocation6 + $0x84] sm:$0xf]
    %v155 = vld [vmem:[#allocation6 + $0x88] sm:$0xf]
    %v156 = vld [vmem:[#allocation6 + $0x8c] sm:$0xf]
    %v157 = vld [vmem:[#allocation6 + $0x90] sm:$0xf]
    %v158 = vld [vmem:[#allocation6 + $0x94] sm:$0xf]
    %v159 = vld [vmem:[#allocation6 + $0x98] sm:$0xf]
    %v160 = vld [vmem:[#allocation6 + $0x9c] sm:$0xf]
    %v161 = vld [vmem:[#allocation6 + $0xa0] sm:$0xf]
    %v162 = vld [vmem:[#allocation6 + $0xa4] sm:$0xf]
    %v163 = vld [vmem:[#allocation6 + $0xa8] sm:$0xf]
    %v164 = vld [vmem:[#allocation6 + $0xac] sm:$0xf]
    %v165 = vld [vmem:[#allocation6 + $0xb0] sm:$0xf]
    %v166 = vld [vmem:[#allocation6 + $0xb4] sm:$0xf]
    %v167 = vld [vmem:[#allocation6 + $0xb8] sm:$0xf]
    %v168 = vld [vmem:[#allocation6 + $0xbc] sm:$0xf]
    %v169 = vld [vmem:[#allocation6 + $0xc0] sm:$0xf]
    %v170 = vld [vmem:[#allocation6 + $0xc4] sm:$0xf]
    %v171 = vld [vmem:[#allocation6 + $0xc8] sm:$0xf]
    %v172 = vld [vmem:[#allocation6 + $0xcc] sm:$0xf]
    %v173 = vld [vmem:[#allocation6 + $0xd0] sm:$0xf]
    %v174 = vld [vmem:[#allocation6 + $0xd4] sm:$0xf]
    %v175 = vld [vmem:[#allocation6 + $0xd8] sm:$0xf]
    %v176 = vld [vmem:[#allocation6 + $0xdc] sm:$0xf]
    %v177 = vld [vmem:[#allocation6 + $0xe0] sm:$0xf]
    %v178 = vld [vmem:[#allocation6 + $0xe4] sm:$0xf]
    %v179 = vld [vmem:[#allocation6 + $0xe8] sm:$0xf]
    %v180 = vld [vmem:[#allocation6 + $0xec] sm:$0xf]
    %v181 = vld [vmem:[#allocation6 + $0xf0] sm:$0xf]
    %v182 = vld [vmem:[#allocation6 + $0xf4] sm:$0xf]
    %v183 = vld [vmem:[#allocation6 + $0xf8] sm:$0xf]
    %v184 = vld [vmem:[#allocation6 + $0xfc] sm:$0xf]
    %v185 = vld [vmem:[#allocation6 + $0x100] sm:$0xf]
    %v186 = vld [vmem:[#allocation6 + $0x104] sm:$0xf]
    %v187 = vld [vmem:[#allocation6 + $0x108] sm:$0xf]
    %v188 = vld [vmem:[#allocation6 + $0x10c] sm:$0xf]
    %v189 = vld [vmem:[#allocation6 + $0x110] sm:$0xf]
    %v190 = vld [vmem:[#allocation6 + $0x114] sm:$0xf]
    %v191 = vld [vmem:[#allocation6 + $0x118] sm:$0xf]
    %v192 = vld [vmem:[#allocation6 + $0x11c] sm:$0xf]
    %v193 = vld [vmem:[#allocation6 + $0x120] sm:$0xf]
    %v194 = vld [vmem:[#allocation6 + $0x124] sm:$0xf]
    %v195 = vld [vmem:[#allocation6 + $0x128] sm:$0xf]
    %v196 = vld [vmem:[#allocation6 + $0x12c] sm:$0xf]
    %v197 = vld [vmem:[#allocation6 + $0x130] sm:$0xf]
    %v198 = vld [vmem:[#allocation6 + $0x134] sm:$0xf]
    %v199 = vld [vmem:[#allocation6 + $0x138] sm:$0xf]
    %v200 = vld [vmem:[#allocation6 + $0x13c] sm:$0xf]
    %v201 = vld [vmem:[#allocation6 + $0x140] sm:$0xf]
    %v202 = vld [vmem:[#allocation6 + $0x144] sm:$0xf]
    %v203 = vld [vmem:[#allocation6 + $0x148] sm:$0xf]
    %v204 = vld [vmem:[#allocation6 + $0x14c] sm:$0xf]
    %v205 = vld [vmem:[#allocation6 + $0x150] sm:$0xf]
    %v206 = vld [vmem:[#allocation6 + $0x154] sm:$0xf]
    %v207 = vld [vmem:[#allocation6 + $0x158] sm:$0xf]
    %v208 = vld [vmem:[#allocation6 + $0x15c] sm:$0xf]
    %v209 = vld [vmem:[#allocation6 + $0x160] sm:$0xf]
    %v210 = vld [vmem:[#allocation6 + $0x164] sm:$0xf]
    %v211 = vld [vmem:[#allocation6 + $0x168] sm:$0xf]
    %v212 = vld [vmem:[#allocation6 + $0x16c] sm:$0xf]
    %v213 = vld [vmem:[#allocation6 + $0x170] sm:$0xf]
    %v214 = vld [vmem:[#allocation6 + $0x174] sm:$0xf]
    %v215 = vld [vmem:[#allocation6 + $0x178] sm:$0xf]
    %v216 = vld [vmem:[#allocation6 + $0x17c] sm:$0xf]
    %v217 = vld [vmem:[#allocation6 + $0x180] sm:$0xf]
    %v218 = vld [vmem:[#allocation6 + $0x184] sm:$0xf]
    %v219 = vld [vmem:[#allocation6 + $0x188] sm:$0xf]
    %v220 = vld [vmem:[#allocation6 + $0x18c] sm:$0xf]
    %v221 = vld [vmem:[#allocation6 + $0x190] sm:$0xf]
    %v222 = vld [vmem:[#allocation6 + $0x194] sm:$0xf]
    %v223 = vld [vmem:[#allocation6 + $0x198] sm:$0xf]
    %v224 = vld [vmem:[#allocation6 + $0x19c] sm:$0xf]
    %v225 = vld [vmem:[#allocation6 + $0x1a0] sm:$0xf]
    %v226 = vld [vmem:[#allocation6 + $0x1a4] sm:$0xf]
    %v227 = vld [vmem:[#allocation6 + $0x1a8] sm:$0xf]
    %v228 = vld [vmem:[#allocation6 + $0x1ac] sm:$0xf]
    %v229 = vld [vmem:[#allocation6 + $0x1b0] sm:$0xf]
    %v230 = vld [vmem:[#allocation6 + $0x1b4] sm:$0xf]
    %v231 = vld [vmem:[#allocation6 + $0x1b8] sm:$0xf]
    %v232 = vld [vmem:[#allocation6 + $0x1bc] sm:$0xf]
    %v233 = vld [vmem:[#allocation6 + $0x1c0] sm:$0xf]
    %v234 = vld [vmem:[#allocation6 + $0x1c4] sm:$0xf]
    %v235 = vld [vmem:[#allocation6 + $0x1c8] sm:$0xf]
    %v236 = vld [vmem:[#allocation6 + $0x1cc] sm:$0xf]
    %v237 = vld [vmem:[#allocation6 + $0x1d0] sm:$0xf]
    %v238 = vld [vmem:[#allocation6 + $0x1d4] sm:$0xf]
    %v239 = vld [vmem:[#allocation6 + $0x1d8] sm:$0xf]
    %v240 = vld [vmem:[#allocation6 + $0x1dc] sm:$0xf]
    %v241 = vld [vmem:[#allocation6 + $0x1e0] sm:$0xf]
    %v242 = vld [vmem:[#allocation6 + $0x1e4] sm:$0xf]
    %v243 = vld [vmem:[#allocation6 + $0x1e8] sm:$0xf]
    %v244 = vld [vmem:[#allocation6 + $0x1ec] sm:$0xf]
    %v245 = vld [vmem:[#allocation6 + $0x1f0] sm:$0xf]
    %v246 = vld [vmem:[#allocation6 + $0x1f4] sm:$0xf]
    %v247 = vld [vmem:[#allocation6 + $0x1f8] sm:$0xf]
    %v248 = vld [vmem:[#allocation6 + $0x1fc] sm:$0xf]
    %v377 = vunpack.c.l.b16 %v121
    %v378 = vunpack.c.l.b16 %v122
    %v379 = vunpack.c.l.b16 %v123
    %v380 = vunpack.c.l.b16 %v124
    %v381 = vunpack.c.l.b16 %v125
    %v382 = vunpack.c.l.b16 %v126
    %v383 = vunpack.c.l.b16 %v127
    %v384 = vunpack.c.l.b16 %v128
    %v385 = vunpack.c.l.b16 %v129
    %v386 = vunpack.c.l.b16 %v130
    %v387 = vunpack.c.l.b16 %v131
    %v388 = vunpack.c.l.b16 %v132
    %v389 = vunpack.c.l.b16 %v133
    %v390 = vunpack.c.l.b16 %v134
    %v391 = vunpack.c.l.b16 %v135
    %v392 = vunpack.c.l.b16 %v136
    %v393 = vunpack.c.l.b16 %v137
    %v394 = vunpack.c.l.b16 %v138
    %v395 = vunpack.c.l.b16 %v139
    %v396 = vunpack.c.l.b16 %v140
    %v397 = vunpack.c.l.b16 %v141
    %v398 = vunpack.c.l.b16 %v142
    %v399 = vunpack.c.l.b16 %v143
    %v400 = vunpack.c.l.b16 %v144
    %v401 = vunpack.c.l.b16 %v145
    %v402 = vunpack.c.l.b16 %v146
    %v403 = vunpack.c.l.b16 %v147
    %v404 = vunpack.c.l.b16 %v148
    %v405 = vunpack.c.l.b16 %v149
    %v406 = vunpack.c.l.b16 %v150
    %v407 = vunpack.c.l.b16 %v151
    %v408 = vunpack.c.l.b16 %v152
    %v409 = vunpack.c.l.b16 %v153
    %v410 = vunpack.c.l.b16 %v154
    %v411 = vunpack.c.l.b16 %v155
    %v412 = vunpack.c.l.b16 %v156
    %v413 = vunpack.c.l.b16 %v157
    %v414 = vunpack.c.l.b16 %v158
    %v415 = vunpack.c.l.b16 %v159
    %v416 = vunpack.c.l.b16 %v160
    %v417 = vunpack.c.l.b16 %v161
    %v418 = vunpack.c.l.b16 %v162
    %v419 = vunpack.c.l.b16 %v163
    %v420 = vunpack.c.l.b16 %v164
    %v421 = vunpack.c.l.b16 %v165
    %v422 = vunpack.c.l.b16 %v166
    %v423 = vunpack.c.l.b16 %v167
    %v424 = vunpack.c.l.b16 %v168
    %v425 = vunpack.c.l.b16 %v169
    %v426 = vunpack.c.l.b16 %v170
    %v427 = vunpack.c.l.b16 %v171
    %v428 = vunpack.c.l.b16 %v172
    %v429 = vunpack.c.l.b16 %v173
    %v430 = vunpack.c.l.b16 %v174
    %v431 = vunpack.c.l.b16 %v175
    %v432 = vunpack.c.l.b16 %v176
    %v433 = vunpack.c.l.b16 %v177
    %v434 = vunpack.c.l.b16 %v178
    %v435 = vunpack.c.l.b16 %v179
    %v436 = vunpack.c.l.b16 %v180
    %v437 = vunpack.c.l.b16 %v181
    %v438 = vunpack.c.l.b16 %v182
    %v439 = vunpack.c.l.b16 %v183
    %v440 = vunpack.c.l.b16 %v184
    %v441 = vunpack.c.l.b16 %v185
    %v442 = vunpack.c.l.b16 %v186
    %v443 = vunpack.c.l.b16 %v187
    %v444 = vunpack.c.l.b16 %v188
    %v445 = vunpack.c.l.b16 %v189
    %v446 = vunpack.c.l.b16 %v190
    %v447 = vunpack.c.l.b16 %v191
    %v448 = vunpack.c.l.b16 %v192
    %v449 = vunpack.c.l.b16 %v193
    %v450 = vunpack.c.l.b16 %v194
    %v451 = vunpack.c.l.b16 %v195
    %v452 = vunpack.c.l.b16 %v196
    %v453 = vunpack.c.l.b16 %v197
    %v454 = vunpack.c.l.b16 %v198
    %v455 = vunpack.c.l.b16 %v199
    %v456 = vunpack.c.l.b16 %v200
    %v457 = vunpack.c.l.b16 %v201
    %v458 = vunpack.c.l.b16 %v202
    %v459 = vunpack.c.l.b16 %v203
    %v460 = vunpack.c.l.b16 %v204
    %v461 = vunpack.c.l.b16 %v205
    %v462 = vunpack.c.l.b16 %v206
    %v463 = vunpack.c.l.b16 %v207
    %v464 = vunpack.c.l.b16 %v208
    %v465 = vunpack.c.l.b16 %v209
    %v466 = vunpack.c.l.b16 %v210
    %v467 = vunpack.c.l.b16 %v211
    %v468 = vunpack.c.l.b16 %v212
    %v469 = vunpack.c.l.b16 %v213
    %v470 = vunpack.c.l.b16 %v214
    %v471 = vunpack.c.l.b16 %v215
    %v472 = vunpack.c.l.b16 %v216
    %v473 = vunpack.c.l.b16 %v217
    %v474 = vunpack.c.l.b16 %v218
    %v475 = vunpack.c.l.b16 %v219
    %v476 = vunpack.c.l.b16 %v220
    %v477 = vunpack.c.l.b16 %v221
    %v478 = vunpack.c.l.b16 %v222
    %v479 = vunpack.c.l.b16 %v223
    %v480 = vunpack.c.l.b16 %v224
    %v481 = vunpack.c.l.b16 %v225
    %v482 = vunpack.c.l.b16 %v226
    %v483 = vunpack.c.l.b16 %v227
    %v484 = vunpack.c.l.b16 %v228
    %v485 = vunpack.c.l.b16 %v229
    %v486 = vunpack.c.l.b16 %v230
    %v487 = vunpack.c.l.b16 %v231
    %v488 = vunpack.c.l.b16 %v232
    %v489 = vunpack.c.l.b16 %v233
    %v490 = vunpack.c.l.b16 %v234
    %v491 = vunpack.c.l.b16 %v235
    %v492 = vunpack.c.l.b16 %v236
    %v493 = vunpack.c.l.b16 %v237
    %v494 = vunpack.c.l.b16 %v238
    %v495 = vunpack.c.l.b16 %v239
    %v496 = vunpack.c.l.b16 %v240
    %v497 = vunpack.c.l.b16 %v241
    %v498 = vunpack.c.l.b16 %v242
    %v499 = vunpack.c.l.b16 %v243
    %v500 = vunpack.c.l.b16 %v244
    %v501 = vunpack.c.l.b16 %v245
    %v502 = vunpack.c.l.b16 %v246
    %v503 = vunpack.c.l.b16 %v247
    %v504 = vunpack.c.l.b16 %v248
    %v505 = vpack.c.b16 %v378, %v377
    %v506 = vpack.c.b16 %v380, %v379
    %v507 = vpack.c.b16 %v382, %v381
    %v508 = vpack.c.b16 %v384, %v383
    %v509 = vpack.c.b16 %v386, %v385
    %v510 = vpack.c.b16 %v388, %v387
    %v511 = vpack.c.b16 %v390, %v389
    %v512 = vpack.c.b16 %v392, %v391
    %v513 = vpack.c.b16 %v394, %v393
    %v514 = vpack.c.b16 %v396, %v395
    %v515 = vpack.c.b16 %v398, %v397
    %v516 = vpack.c.b16 %v400, %v399
    %v517 = vpack.c.b16 %v402, %v401
    %v518 = vpack.c.b16 %v404, %v403
    %v519 = vpack.c.b16 %v406, %v405
    %v520 = vpack.c.b16 %v408, %v407
    %v521 = vpack.c.b16 %v410, %v409
    %v522 = vpack.c.b16 %v412, %v411
    %v523 = vpack.c.b16 %v414, %v413
    %v524 = vpack.c.b16 %v416, %v415
    %v525 = vpack.c.b16 %v418, %v417
    %v526 = vpack.c.b16 %v420, %v419
    %v527 = vpack.c.b16 %v422, %v421
    %v528 = vpack.c.b16 %v424, %v423
    %v529 = vpack.c.b16 %v426, %v425
    %v530 = vpack.c.b16 %v428, %v427
    %v531 = vpack.c.b16 %v430, %v429
    %v532 = vpack.c.b16 %v432, %v431
    %v533 = vpack.c.b16 %v434, %v433
    %v534 = vpack.c.b16 %v436, %v435
    %v535 = vpack.c.b16 %v438, %v437
    %v536 = vpack.c.b16 %v440, %v439
    %v537 = vpack.c.b16 %v442, %v441
    %v538 = vpack.c.b16 %v444, %v443
    %v539 = vpack.c.b16 %v446, %v445
    %v540 = vpack.c.b16 %v448, %v447
    %v541 = vpack.c.b16 %v450, %v449
    %v542 = vpack.c.b16 %v452, %v451
    %v543 = vpack.c.b16 %v454, %v453
    %v544 = vpack.c.b16 %v456, %v455
    %v545 = vpack.c.b16 %v458, %v457
    %v546 = vpack.c.b16 %v460, %v459
    %v547 = vpack.c.b16 %v462, %v461
    %v548 = vpack.c.b16 %v464, %v463
    %v549 = vpack.c.b16 %v466, %v465
    %v550 = vpack.c.b16 %v468, %v467
    %v551 = vpack.c.b16 %v470, %v469
    %v552 = vpack.c.b16 %v472, %v471
    %v553 = vpack.c.b16 %v474, %v473
    %v554 = vpack.c.b16 %v476, %v475
    %v555 = vpack.c.b16 %v478, %v477
    %v556 = vpack.c.b16 %v480, %v479
    %v557 = vpack.c.b16 %v482, %v481
    %v558 = vpack.c.b16 %v484, %v483
    %v559 = vpack.c.b16 %v486, %v485
    %v560 = vpack.c.b16 %v488, %v487
    %v561 = vpack.c.b16 %v490, %v489
    %v562 = vpack.c.b16 %v492, %v491
    %v563 = vpack.c.b16 %v494, %v493
    %v564 = vpack.c.b16 %v496, %v495
    %v565 = vpack.c.b16 %v498, %v497
    %v566 = vpack.c.b16 %v500, %v499
    %v567 = vpack.c.b16 %v502, %v501
    %v568 = vpack.c.b16 %v504, %v503
    %633 = vmatprep.subr.bf16.mxu0 0
    %634 = vmatpush1.bf16.msra.mxu0 %v512
    %635 = vmatprep.subr.bf16.mxu0 0
    %636 = vmatpush1.bf16.msra.mxu0 %v511
    %637 = vmatprep.subr.bf16.mxu0 0
    %638 = vmatpush1.bf16.msra.mxu0 %v510
    %639 = vmatprep.subr.bf16.mxu0 0
    %640 = vmatpush1.bf16.msra.mxu0 %v509
    %641 = vmatprep.subr.bf16.mxu0 0
    %642 = vmatpush1.bf16.msra.mxu0 %v508
    %643 = vmatprep.subr.bf16.mxu0 0
    %644 = vmatpush1.bf16.msra.mxu0 %v507
    %645 = vmatprep.subr.bf16.mxu0 0
    %646 = vmatpush1.bf16.msra.mxu0 %v506
    %647 = vmatprep.subr.bf16.mxu0 0
    %648 = vmatpush1.bf16.msra.mxu0 %v505
    %649 = vmatprep.subr.bf16.mxu0 0
    %650 = vmatpush2.bf16.msra.mxu0 %v520
    %651 = vmatprep.subr.bf16.mxu0 0
    %652 = vmatpush2.bf16.msra.mxu0 %v519
    %653 = vmatprep.subr.bf16.mxu0 0
    %654 = vmatpush2.bf16.msra.mxu0 %v518
    %655 = vmatprep.subr.bf16.mxu0 0
    %656 = vmatpush2.bf16.msra.mxu0 %v517
    %657 = vmatprep.subr.bf16.mxu0 0
    %658 = vmatpush2.bf16.msra.mxu0 %v516
    %659 = vmatprep.subr.bf16.mxu0 0
    %660 = vmatpush2.bf16.msra.mxu0 %v515
    %661 = vmatprep.subr.bf16.mxu0 0
    %662 = vmatpush2.bf16.msra.mxu0 %v514
    %663 = vmatprep.subr.bf16.mxu0 0
    %664 = vmatpush2.bf16.msra.mxu0 %v513
    %665 = vmatprep.mubr.bf16.mxu0 %v114
    %666 = vmatmul.mubr.bf16.gmra.mxu0 %v113
    %v667 = vpop.f32.mrf.mxu0
    %v668 = vadd.f32 0.0, %v667
    %v669 = vpop.f32.mrf.mxu0
    %v670 = vpop.f32.mrf.mxu0
    %v671 = vpop.f32.mrf.mxu0
    %672 = vdwg.mxu0
    %673 = vmatprep.subr.bf16.mxu0 0
    %674 = vmatpush1.bf16.msra.mxu0 %v528
    %675 = vmatprep.subr.bf16.mxu0 0
    %676 = vmatpush1.bf16.msra.mxu0 %v527
    %677 = vmatprep.subr.bf16.mxu0 0
    %678 = vmatpush1.bf16.msra.mxu0 %v526
    %679 = vmatprep.subr.bf16.mxu0 0
    %680 = vmatpush1.bf16.msra.mxu0 %v525
    %681 = vmatprep.subr.bf16.mxu0 0
    %682 = vmatpush1.bf16.msra.mxu0 %v524
    %683 = vmatprep.subr.bf16.mxu0 0
    %684 = vmatpush1.bf16.msra.mxu0 %v523
    %685 = vmatprep.subr.bf16.mxu0 0
    %686 = vmatpush1.bf16.msra.mxu0 %v522
    %687 = vmatprep.subr.bf16.mxu0 0
    %688 = vmatpush1.bf16.msra.mxu0 %v521
    %689 = vmatprep.subr.bf16.mxu0 0
    %690 = vmatpush2.bf16.msra.mxu0 %v536
    %691 = vmatprep.subr.bf16.mxu0 0
    %692 = vmatpush2.bf16.msra.mxu0 %v535
    %693 = vmatprep.subr.bf16.mxu0 0
    %694 = vmatpush2.bf16.msra.mxu0 %v534
    %695 = vmatprep.subr.bf16.mxu0 0
    %696 = vmatpush2.bf16.msra.mxu0 %v533
    %697 = vmatprep.subr.bf16.mxu0 0
    %698 = vmatpush2.bf16.msra.mxu0 %v532
    %699 = vmatprep.subr.bf16.mxu0 0
    %700 = vmatpush2.bf16.msra.mxu0 %v531
    %701 = vmatprep.subr.bf16.mxu0 0
    %702 = vmatpush2.bf16.msra.mxu0 %v530
    %703 = vmatprep.subr.bf16.mxu0 0
    %704 = vmatpush2.bf16.msra.mxu0 %v529
    %705 = vmatprep.mubr.bf16.mxu0 %v116
    %706 = vmatmul.mubr.bf16.gmra.mxu0 %v115
    %v707 = vpop.f32.mrf.mxu0
    %v708 = vadd.f32 %v668, %v707
    %v709 = vpop.f32.mrf.mxu0
    %v710 = vpop.f32.mrf.mxu0
    %v711 = vpop.f32.mrf.mxu0
    %712 = vdwg.mxu0
    %713 = vmatprep.subr.bf16.mxu0 0
    %714 = vmatpush1.bf16.msra.mxu0 %v544
    %715 = vmatprep.subr.bf16.mxu0 0
    %716 = vmatpush1.bf16.msra.mxu0 %v543
    %717 = vmatprep.subr.bf16.mxu0 0
    %718 = vmatpush1.bf16.msra.mxu0 %v542
    %719 = vmatprep.subr.bf16.mxu0 0
    %720 = vmatpush1.bf16.msra.mxu0 %v541
    %721 = vmatprep.subr.bf16.mxu0 0
    %722 = vmatpush1.bf16.msra.mxu0 %v540
    %723 = vmatprep.subr.bf16.mxu0 0
    %724 = vmatpush1.bf16.msra.mxu0 %v539
    %725 = vmatprep.subr.bf16.mxu0 0
    %726 = vmatpush1.bf16.msra.mxu0 %v538
    %727 = vmatprep.subr.bf16.mxu0 0
    %728 = vmatpush1.bf16.msra.mxu0 %v537
    %729 = vmatprep.subr.bf16.mxu0 0
    %730 = vmatpush2.bf16.msra.mxu0 %v552
    %731 = vmatprep.subr.bf16.mxu0 0
    %732 = vmatpush2.bf16.msra.mxu0 %v551
    %733 = vmatprep.subr.bf16.mxu0 0
    %734 = vmatpush2.bf16.msra.mxu0 %v550
    %735 = vmatprep.subr.bf16.mxu0 0
    %736 = vmatpush2.bf16.msra.mxu0 %v549
    %737 = vmatprep.subr.bf16.mxu0 0
    %738 = vmatpush2.bf16.msra.mxu0 %v548
    %739 = vmatprep.subr.bf16.mxu0 0
    %740 = vmatpush2.bf16.msra.mxu0 %v547
    %741 = vmatprep.subr.bf16.mxu0 0
    %742 = vmatpush2.bf16.msra.mxu0 %v546
    %743 = vmatprep.subr.bf16.mxu0 0
    %744 = vmatpush2.bf16.msra.mxu0 %v545
    %745 = vmatprep.mubr.bf16.mxu0 %v118
    %746 = vmatmul.mubr.bf16.gmra.mxu0 %v117
    %v747 = vpop.f32.mrf.mxu0
    %v748 = vadd.f32 %v708, %v747
    %v749 = vpop.f32.mrf.mxu0
    %v750 = vpop.f32.mrf.mxu0
    %v751 = vpop.f32.mrf.mxu0
    %752 = vdwg.mxu0
    %753 = vmatprep.subr.bf16.mxu0 0
    %754 = vmatpush1.bf16.msra.mxu0 %v560
    %755 = vmatprep.subr.bf16.mxu0 0
    %756 = vmatpush1.bf16.msra.mxu0 %v559
    %757 = vmatprep.subr.bf16.mxu0 0
    %758 = vmatpush1.bf16.msra.mxu0 %v558
    %759 = vmatprep.subr.bf16.mxu0 0
    %760 = vmatpush1.bf16.msra.mxu0 %v557
    %761 = vmatprep.subr.bf16.mxu0 0
    %762 = vmatpush1.bf16.msra.mxu0 %v556
    %763 = vmatprep.subr.bf16.mxu0 0
    %764 = vmatpush1.bf16.msra.mxu0 %v555
    %765 = vmatprep.subr.bf16.mxu0 0
    %766 = vmatpush1.bf16.msra.mxu0 %v554
    %767 = vmatprep.subr.bf16.mxu0 0
    %768 = vmatpush1.bf16.msra.mxu0 %v553
    %769 = vmatprep.subr.bf16.mxu0 0
    %770 = vmatpush2.bf16.msra.mxu0 %v568
    %771 = vmatprep.subr.bf16.mxu0 0
    %772 = vmatpush2.bf16.msra.mxu0 %v567
    %773 = vmatprep.subr.bf16.mxu0 0
    %774 = vmatpush2.bf16.msra.mxu0 %v566
    %775 = vmatprep.subr.bf16.mxu0 0
    %776 = vmatpush2.bf16.msra.mxu0 %v565
    %777 = vmatprep.subr.bf16.mxu0 0
    %778 = vmatpush2.bf16.msra.mxu0 %v564
    %779 = vmatprep.subr.bf16.mxu0 0
    %780 = vmatpush2.bf16.msra.mxu0 %v563
    %781 = vmatprep.subr.bf16.mxu0 0
    %782 = vmatpush2.bf16.msra.mxu0 %v562
    %783 = vmatprep.subr.bf16.mxu0 0
    %784 = vmatpush2.bf16.msra.mxu0 %v561
    %785 = vmatprep.mubr.bf16.mxu0 %v120
    %786 = vmatmul.mubr.bf16.gmra.mxu0 %v119
    %v787 = vpop.f32.mrf.mxu0
    %v788 = vadd.f32 %v748, %v787
    %v789 = vpop.f32.mrf.mxu0
    %v790 = vpop.f32.mrf.mxu0
    %v791 = vpop.f32.mrf.mxu0
    %792 = vdwg.mxu0
    %v793 = vadd.f32 %v66, %v788
    %794 = vst [vmem:[#allocation2] sm:$0x3] %v793
    // Predicated region
    $region38: #{tpu_custom_call.1} parent=1 // pred_check
      %p795 = pneg %p61
    $region39: #{tpu_custom_call.1} parent=1 // pred_check_branch
      %797 = sbr.rel (%p795) target = $region41
    $region40: #{tpu_custom_call.1} parent=1 // pred_region
      %v798 = vld [vmem:[#allocation2] sm:$0x3]
      %v799 = vld [vmem:[%s2] sm:$0x1]
      %v801 = vlaneseq
      %v802 = vshrl.u32 %v801, 7
      %v803 = vsub.s32 0, %v802
      %v804 = vrot.slane %v799, %v803
      %v806 = vadd.f32 %v798, %v804
      %v807 = vmax.f32 %v806, 0.0
      %808 = vst [vmem:[#allocation2] sm:$0x3] %v807
      %v809 = vld [vmem:[#allocation2] sm:$0x3]
      %v810 = vpack.c.bf16 %v809, %v809
      %v811 = vld [vmem:[#allocation8] sm:$0xf]
      %v812 = vld [vmem:[#allocation8 + $0x4] sm:$0xf]
      %v813 = vld [vmem:[#allocation8 + $0x8] sm:$0xf]
      %v814 = vld [vmem:[#allocation8 + $0xc] sm:$0xf]
      %v815 = vld [vmem:[#allocation8 + $0x10] sm:$0xf]
      %v816 = vld [vmem:[#allocation8 + $0x14] sm:$0xf]
      %v817 = vld [vmem:[#allocation8 + $0x18] sm:$0xf]
      %v818 = vld [vmem:[#allocation8 + $0x1c] sm:$0xf]
      %v819 = vld [vmem:[#allocation8 + $0x20] sm:$0xf]
      %v820 = vld [vmem:[#allocation8 + $0x24] sm:$0xf]
      %v821 = vld [vmem:[#allocation8 + $0x28] sm:$0xf]
      %v822 = vld [vmem:[#allocation8 + $0x2c] sm:$0xf]
      %v823 = vld [vmem:[#allocation8 + $0x30] sm:$0xf]
      %v824 = vld [vmem:[#allocation8 + $0x34] sm:$0xf]
      %v825 = vld [vmem:[#allocation8 + $0x38] sm:$0xf]
      %v826 = vld [vmem:[#allocation8 + $0x3c] sm:$0xf]
      %v827 = vld [vmem:[%s4] sm:$0x1]
      %v829 = vlaneseq
      %v830 = vshrl.u32 %v829, 7
      %v831 = vsub.s32 0, %v830
      %v832 = vrot.slane %v827, %v831
      %v850 = vunpack.c.l.b16 %v811
      %v851 = vunpack.c.l.b16 %v812
      %v852 = vunpack.c.l.b16 %v813
      %v853 = vunpack.c.l.b16 %v814
      %v854 = vunpack.c.l.b16 %v815
      %v855 = vunpack.c.l.b16 %v816
      %v856 = vunpack.c.l.b16 %v817
      %v857 = vunpack.c.l.b16 %v818
      %v858 = vunpack.c.l.b16 %v819
      %v859 = vunpack.c.l.b16 %v820
      %v860 = vunpack.c.l.b16 %v821
      %v861 = vunpack.c.l.b16 %v822
      %v862 = vunpack.c.l.b16 %v823
      %v863 = vunpack.c.l.b16 %v824
      %v864 = vunpack.c.l.b16 %v825
      %v865 = vunpack.c.l.b16 %v826
      %v866 = vpack.c.b16 %v851, %v850
      %v867 = vpack.c.b16 %v853, %v852
      %v868 = vpack.c.b16 %v855, %v854
      %v869 = vpack.c.b16 %v857, %v856
      %v870 = vpack.c.b16 %v859, %v858
      %v871 = vpack.c.b16 %v861, %v860
      %v872 = vpack.c.b16 %v863, %v862
      %v873 = vpack.c.b16 %v865, %v864
      %882 = vmatprep.subr.bf16.mxu0 0
      %883 = vmatpush1.bf16.msra.mxu0 %v873
      %884 = vmatprep.subr.bf16.mxu0 0
      %885 = vmatpush1.bf16.msra.mxu0 %v872
      %886 = vmatprep.subr.bf16.mxu0 0
      %887 = vmatpush1.bf16.msra.mxu0 %v871
      %888 = vmatprep.subr.bf16.mxu0 0
      %889 = vmatpush1.bf16.msra.mxu0 %v870
      %890 = vmatprep.subr.bf16.mxu0 0
      %891 = vmatpush1.bf16.msra.mxu0 %v869
      %892 = vmatprep.subr.bf16.mxu0 0
      %893 = vmatpush1.bf16.msra.mxu0 %v868
      %894 = vmatprep.subr.bf16.mxu0 0
      %895 = vmatpush1.bf16.msra.mxu0 %v867
      %896 = vmatprep.subr.bf16.mxu0 0
      %897 = vmatpush1.bf16.msra.mxu0 %v866
      %898 = vmatprep.subr.bf16.mxu0 0
      %899 = vmatpush2.bf16.msra.mxu0 0
      %900 = vmatprep.subr.bf16.mxu0 0
      %901 = vmatpush2.bf16.msra.mxu0 0
      %902 = vmatprep.subr.bf16.mxu0 0
      %903 = vmatpush2.bf16.msra.mxu0 0
      %904 = vmatprep.subr.bf16.mxu0 0
      %905 = vmatpush2.bf16.msra.mxu0 0
      %906 = vmatprep.subr.bf16.mxu0 0
      %907 = vmatpush2.bf16.msra.mxu0 0
      %908 = vmatprep.subr.bf16.mxu0 0
      %909 = vmatpush2.bf16.msra.mxu0 0
      %910 = vmatprep.subr.bf16.mxu0 0
      %911 = vmatpush2.bf16.msra.mxu0 0
      %912 = vmatprep.subr.bf16.mxu0 0
      %913 = vmatpush2.bf16.msra.mxu0 0
      %914 = vmatprep.mubr.bf16.mxu0 0
      %915 = vmatmul.mubr.bf16.gmra.mxu0 %v810
      %v916 = vpop.f32.mrf.mxu0
      %v917 = vadd.f32 %v832, %v916
      %v918 = vpop.f32.mrf.mxu0
      %v919 = vpop.f32.mrf.mxu0
      %v920 = vpop.f32.mrf.mxu0
      %921 = vdwg.mxu0
      %922 = vst [vmem:[#allocation9] sm:$0x3] %v917
    $region41: #{tpu_custom_call.1} parent=1 // pred_fallthru
      _
    // Predicated region
    $region42: #{tpu_custom_call.1} parent=1 // pred_check
      _
    $region43: #{tpu_custom_call.1} parent=1 // pred_check_branch
      %924 = sbr.rel (0) target = $region45
    $region44: #{tpu_custom_call.1} parent=1 // pred_region
      %s926 = ssub.s32 32, 32
      %927 = vsyncadd [#allocation5], %s926
      %s929 = sshll.u32 [#allocation9], 4
      %s930 = int_to_ptr.vmem [resolvable:$true] %s929
      %932 = dma.vmem_to_hbm [thread:$0]  %s930, 32, %s5, [#allocation5]
    $region45: #{tpu_custom_call.1} parent=1 // pred_fallthru
      _
    // Predicated region
    $region46: #{tpu_custom_call.1} parent=1 // pred_check
      _
    $region47: #{tpu_custom_call.1} parent=1 // pred_check_branch
      %934 = sbr.rel (0) target = $region49
    $region48: #{tpu_custom_call.1} parent=1 // pred_region
      %935 = dma.done [#allocation5], 32
    $region49: #{tpu_custom_call.1} parent=1 // pred_fallthru
      _
    %936 = vsyncpa [#allocation4], 1
    %937 = vsyncpa [#allocation7], 1
    %938 = vsyncpa [#allocation5], 1

</llo_original>
